<compile_context>
chip_gen: v7x
topology: tpu7x:2x2x1
jax: 0.10.0
libtpu: 0.0.40
codegen_flags: <defaults>
</compile_context>

<pallas_src>
import numpy as np
import jax
import jax.numpy as jnp
from jax.experimental import pallas as pl
from jax.experimental.pallas import tpu as pltpu


# Max tile sizes (MXU-friendly multiples of 128). The double-buffered working
# set at these caps is ~14 MiB, safely under v7x's 64 MiB VMEM while large
# enough to sit near HBM roofline on v5e/v6e.
_TM_MAX = 512
_TN_MAX = 512
_TK_MAX = 2048


def _round_up(x, m):
    return (x + m - 1) // m * m


def _cdiv(a, b):
    return (a + b - 1) // b


def _choose_tile(dim, t_max, align):
    """Padding-minimizing tile choice: returns (tile, padded_dim)."""
    n_tiles = max(1, _cdiv(dim, t_max))
    tile = _round_up(_cdiv(dim, n_tiles), align)
    return tile, n_tiles * tile


def _vmem_limit_bytes():
    """Per-generation scoped-VMEM limit derived from physical capacity."""
    cap = 64 * 1024 * 1024  # conservative default (v7x per-TC VMEM)
    try:
        info = pltpu.get_tpu_info()
        for attr in ("vmem_capacity_bytes", "vmem_size_bytes", "vmem_bytes"):
            v = getattr(info, attr, None)
            if v:
                cap = int(v)
                break
    except Exception:
        pass
    # v5e/v6e (128 MiB physical): raise scoped limit so big tiles fit.
    # v7x (64 MiB physical): keep combined usage comfortably <= 40 MiB.
    return 96 * 1024 * 1024 if cap >= 96 * 1024 * 1024 else 40 * 1024 * 1024


def _linear_prelu_kernel_acc(alpha_ref, x_ref, w_ref, b_ref, o_ref, acc_ref):
    # grid = (M//tm, N//tn, K//tk); K is the innermost reduction axis.
    k = pl.program_id(2)

    @pl.when(k == 0)
    def _():
        acc_ref[...] = jnp.zeros_like(acc_ref)

    x_tile = x_ref[...]
    if x_tile.dtype != jnp.bfloat16:          # cast in-kernel (no wrapper pass)
        x_tile = x_tile.astype(jnp.bfloat16)
    acc_ref[...] += jnp.dot(x_tile, w_ref[...],
                            preferred_element_type=jnp.float32)

    @pl.when(k == pl.num_programs(2) - 1)
    def _():
        h = acc_ref[...] + b_ref[...]          # f32 bias broadcast over batch
        alpha = alpha_ref[0]                   # scalar PReLU slope from SMEM
        o_ref[...] = jnp.where(h > 0.0, h, alpha * h).astype(o_ref.dtype)


def _linear_prelu_kernel_f32out(alpha_ref, x_ref, w_ref, b_ref, o_ref):
    # f32 output: output block index is constant across k, so the tile is
    # resident -> accumulate directly into o_ref, no VMEM scratch needed.
    k = pl.program_id(2)

    @pl.when(k == 0)
    def _():
        o_ref[...] = jnp.zeros_like(o_ref)

    x_tile = x_ref[...]
    if x_tile.dtype != jnp.bfloat16:
        x_tile = x_tile.astype(jnp.bfloat16)
    o_ref[...] += jnp.dot(x_tile, w_ref[...],
                          preferred_element_type=jnp.float32)

    @pl.when(k == pl.num_programs(2) - 1)
    def _():
        h = o_ref[...] + b_ref[...]
        alpha = alpha_ref[0]
        o_ref[...] = jnp.where(h > 0.0, h, alpha * h)


def pack_params(w, b, alpha):
    """Pad + pre-cast parameters ONCE at creation time (no per-call cost).

    w: (out_dim, in_dim) f32 (PyTorch nn.Linear layout).
    Returns dict with W pre-transposed to (Kp, Np) bf16, bias (1, Np) f32,
    scalar PReLU slope, and the true (d_in, d_out) for output slicing.
    """
    w = np.asarray(w, np.float32)
    d_out, d_in = w.shape
    _, Kp = _choose_tile(d_in, _TK_MAX, 128)
    _, Np = _choose_tile(d_out, _TN_MAX, 128)
    w_t = np.zeros((Kp, Np), np.float32)
    w_t[:d_in, :d_out] = w.T                               # (d_in, d_out)
    b_p = np.zeros((1, Np), np.float32)
    b_p[0, :d_out] = np.asarray(b, np.float32)
    return dict(
        w_t=jnp.asarray(w_t, dtype=jnp.bfloat16),          # pre-cast for MXU
        bias=jnp.asarray(b_p),                              # f32 epilogue
        alpha=jnp.asarray(np.float32(alpha)).reshape(1),
        d_in=d_in,
        d_out=d_out,
    )


def make_params(input_dim, out_dim, seed=0):
    """Mirror LinearLayer.__init__: W ~ N(0,1)/sqrt(d_in), b = 0.1, PReLU a = 0.25."""
    rng = np.random.RandomState(seed)
    w = rng.randn(out_dim, input_dim).astype(np.float32) / np.sqrt(input_dim)
    b = np.zeros((out_dim,), np.float32) + 0.1
    alpha = np.float32(0.25)                                # torch PReLU default
    return pack_params(w, b, alpha), (w, b, alpha)
    # TODO(synk): batch_norm / dropout / sigmoid branches are disabled by the
    # module's default flags and not implemented.


def linear_layer_forward(x, params, *, out_dtype=jnp.bfloat16):
    """Pallas equivalent of LinearLayer.forward (default flags).

    x: (B, d_in) f32 or bf16; params from pack_params/make_params.
    """
    d_in, d_out = params["d_in"], params["d_out"]
    w_p = params["w_t"]         # (Kp, Np) bf16, pre-padded + pre-cast
    b_p = params["bias"]        # (1, Np) f32, pre-padded
    alpha_arr = params["alpha"]

    B = x.shape[0]
    assert x.shape[1] == d_in

    tk, Kp = _choose_tile(d_in, _TK_MAX, 128)
    tn, Np = _choose_tile(d_out, _TN_MAX, 128)
    tm, Mp = _choose_tile(B, _TM_MAX, 8)
    assert w_p.shape == (Kp, Np) and b_p.shape == (1, Np)

    # Guarantee >=2 blocks along the parallel (M,N) axes when possible so both
    # v7x TensorCores get work (harmless on single-TC v5e/v6e).
    if (Mp // tm) * (Np // tn) == 1:
        if tm % 16 == 0:
            tm //= 2
        elif tn % 256 == 0:
            tn //= 2

    # Only x may need per-call padding (zero K-padding keeps the dot exact).
    if Mp != B or Kp != d_in:
        x = jnp.pad(x, ((0, Mp - B), (0, Kp - d_in)))

    grid = (Mp // tm, Np // tn, Kp // tk)
    in_specs = [
        pl.BlockSpec((tm, tk), lambda i, j, k, a: (i, k)),   # x tile
        pl.BlockSpec((tk, tn), lambda i, j, k, a: (k, j)),   # W^T tile (bf16)
        pl.BlockSpec((1, tn), lambda i, j, k, a: (0, j)),    # bias tile (f32)
    ]
    out_spec = pl.BlockSpec((tm, tn), lambda i, j, k, a: (i, j))

    if np.dtype(out_dtype) == np.dtype(np.float32):
        kernel = _linear_prelu_kernel_f32out
        scratch = []                                        # acc lives in o_ref
    else:
        kernel = _linear_prelu_kernel_acc
        scratch = [pltpu.VMEM((tm, tn), jnp.float32)]       # f32 accumulator

    out_p = pl.pallas_call(
        kernel,
        out_shape=jax.ShapeDtypeStruct((Mp, Np), out_dtype),
        grid_spec=pltpu.PrefetchScalarGridSpec(
            num_scalar_prefetch=1,                          # alpha -> SMEM
            grid=grid,
            in_specs=in_specs,
            out_specs=out_spec,
            scratch_shapes=scratch,
        ),
        compiler_params=pltpu.CompilerParams(
            dimension_semantics=("parallel", "parallel", "arbitrary"),
            vmem_limit_bytes=_vmem_limit_bytes(),
        ),
    )(alpha_arr, x, w_p, b_p)

    if Mp != B or Np != d_out:
        out_p = out_p[:B, :d_out]   # drop padded rows/cols (only valid output)
    return out_p


def _reference(x, w, b, alpha):
    h = x @ jnp.asarray(w).T + jnp.asarray(b)
    return jnp.where(h > 0, h, jnp.float32(alpha) * h)


if __name__ == "__main__":
    # --- small shape matching the module's intent (single grid tile) -------
    batch, input_dim, out_dim = 8, 32, 16
    x = jax.random.normal(jax.random.PRNGKey(0), (batch, input_dim), jnp.float32)
    params, (w_raw, b_raw, a_raw) = make_params(input_dim, out_dim, seed=0)

    out = jax.block_until_ready(linear_layer_forward(x, params))   # bf16 out
    assert out.shape == (batch, out_dim) and out.dtype == jnp.bfloat16
    ref = _reference(x, w_raw, b_raw, a_raw)
    np.testing.assert_allclose(np.asarray(out, np.float32), np.asarray(ref),
                               rtol=3e-2, atol=3e-2)

    # same shape, f32 output -> direct-accumulate kernel (no VMEM scratch)
    out32 = jax.block_until_ready(
        linear_layer_forward(x, params, out_dtype=jnp.float32))
    assert out32.shape == (batch, out_dim) and out32.dtype == jnp.float32
    np.testing.assert_allclose(np.asarray(out32), np.asarray(ref),
                               rtol=2e-2, atol=2e-2)

    # --- medium shape exercising multi-tile M, K reduction (2 k-steps) -----
    b2, din2, dout2 = 256, 2304, 384
    x2 = jax.random.normal(jax.random.PRNGKey(1), (b2, din2), jnp.float32)
    params2, (w2_raw, b2_raw, a2_raw) = make_params(din2, dout2, seed=1)

    out2 = jax.block_until_ready(linear_layer_forward(x2, params2))
    assert out2.shape == (b2, dout2)
    ref2 = _reference(x2, w2_raw, b2_raw, a2_raw)
    np.testing.assert_allclose(np.asarray(out2, np.float32), np.asarray(ref2),
                               rtol=3e-2, atol=3e-2)

    print("KERNEL_OK")
</pallas_src>

<mosaic_0001>
module attributes {stable_mosaic.version = 11 : i64} {
  func.func @_linear_prelu_kernel_acc(%arg0: i32, %arg1: i32, %arg2: i32, %arg3: memref<1xf32, #tpu.memory_space<smem>>, %arg4: memref<8x128xf32, #tpu.memory_space<vmem>>, %arg5: memref<128x128xbf16, #tpu.memory_space<vmem>>, %arg6: memref<1x128xf32, #tpu.memory_space<vmem>>, %arg7: memref<8x128xbf16, #tpu.memory_space<vmem>>, %arg8: memref<8x128xf32, #tpu.memory_space<vmem>>) attributes {dimension_semantics = [#tpu.dimension_semantics<parallel>, #tpu.dimension_semantics<parallel>, #tpu.dimension_semantics<arbitrary>], iteration_bounds = array<i64: 1, 1, 1>, scalar_prefetch = 1 : i64, scratch_operands = 1 : i64, tpu.core_type = #tpu.core_type<tc>, window_params = [{transform_indices = @transform_0, window_bounds = array<i64: 8, 128>}, {transform_indices = @transform_1, window_bounds = array<i64: 128, 128>}, {transform_indices = @transform_2, window_bounds = array<i64: 1, 128>}, {transform_indices = @transform_3, window_bounds = array<i64: 8, 128>}]} {
    %c0_i32 = arith.constant 0 : i32
    %0 = arith.cmpi eq, %arg2, %c0_i32 : i32
    %1 = arith.extui %0 : i1 to i32
    %c0_i32_0 = arith.constant 0 : i32
    %2 = arith.cmpi ne, %1, %c0_i32_0 : i32
    scf.if %2 {
      %cst_10 = arith.constant 0.000000e+00 : f32
      %13 = vector.broadcast %cst_10 : f32 to vector<8x128xf32>
      %c0_11 = arith.constant 0 : index
      %c0_12 = arith.constant 0 : index
      %14 = vector.load %arg8[%c0_11, %c0_12] : memref<8x128xf32, #tpu.memory_space<vmem>>, vector<8x128xf32>
      tpu.vector_store %arg8[%c0_11, %c0_12], %13 {strides = array<i32>} : memref<8x128xf32, #tpu.memory_space<vmem>>, vector<8x128xf32>,
    } else {
    }
    %c0 = arith.constant 0 : index
    %c0_1 = arith.constant 0 : index
    %3 = vector.load %arg4[%c0, %c0_1] : memref<8x128xf32, #tpu.memory_space<vmem>>, vector<8x128xf32>
    %4 = arith.truncf %3 : vector<8x128xf32> to vector<8x128xbf16>
    %c0_2 = arith.constant 0 : index
    %c0_3 = arith.constant 0 : index
    %5 = vector.load %arg8[%c0_2, %c0_3] : memref<8x128xf32, #tpu.memory_space<vmem>>, vector<8x128xf32>
    %c0_4 = arith.constant 0 : index
    %c0_5 = arith.constant 0 : index
    %6 = vector.load %arg5[%c0_4, %c0_5] : memref<128x128xbf16, #tpu.memory_space<vmem>>, vector<128x128xbf16>
    %cst = arith.constant dense<0.000000e+00> : vector<8x128xf32>
    %7 = tpu.matmul %4, %6, %cst {dimension_numbers = #tpu.dot_dimension_numbers<[1], [0], [0], [1], [0, 0, 1, 1], [], []>} : vector<8x128xbf16>, vector<128x128xbf16>, vector<8x128xf32> -> vector<8x128xf32>
    %8 = arith.addf %5, %7 : vector<8x128xf32>
    %c0_6 = arith.constant 0 : index
    %c0_7 = arith.constant 0 : index
    %9 = vector.load %arg8[%c0_6, %c0_7] : memref<8x128xf32, #tpu.memory_space<vmem>>, vector<8x128xf32>
    tpu.vector_store %arg8[%c0_6, %c0_7], %8 {strides = array<i32>} : memref<8x128xf32, #tpu.memory_space<vmem>>, vector<8x128xf32>,
    %c0_i32_8 = arith.constant 0 : i32
    %10 = arith.cmpi eq, %arg2, %c0_i32_8 : i32
    %11 = arith.extui %10 : i1 to i32
    %c0_i32_9 = arith.constant 0 : i32
    %12 = arith.cmpi ne, %11, %c0_i32_9 : i32
    scf.if %12 {
      %c0_10 = arith.constant 0 : index
      %c0_11 = arith.constant 0 : index
      %13 = vector.load %arg8[%c0_10, %c0_11] : memref<8x128xf32, #tpu.memory_space<vmem>>, vector<8x128xf32>
      %c0_12 = arith.constant 0 : index
      %c0_13 = arith.constant 0 : index
      %14 = vector.load %arg6[%c0_12, %c0_13] : memref<1x128xf32, #tpu.memory_space<vmem>>, vector<1x128xf32>
      %15 = vector.broadcast %14 : vector<1x128xf32> to vector<8x128xf32>
      %16 = arith.addf %13, %15 : vector<8x128xf32>
      %c0_14 = arith.constant 0 : index
      %17 = memref.load %arg3[%c0_14] : memref<1xf32, #tpu.memory_space<smem>>
      %cst_15 = arith.constant 0.000000e+00 : f32
      %18 = vector.broadcast %cst_15 : f32 to vector<8x128xf32>
      %19 = arith.cmpf ogt, %16, %18 : vector<8x128xf32>
      %20 = vector.broadcast %17 : f32 to vector<8x128xf32>
      %21 = arith.mulf %20, %16 : vector<8x128xf32>
      %22 = arith.select %19, %16, %21 : vector<8x128xi1>, vector<8x128xf32>
      %23 = arith.truncf %22 : vector<8x128xf32> to vector<8x128xbf16>
      %c0_16 = arith.constant 0 : index
      %c0_17 = arith.constant 0 : index
      %24 = vector.load %arg7[%c0_16, %c0_17] : memref<8x128xbf16, #tpu.memory_space<vmem>>, vector<8x128xbf16>
      tpu.vector_store %arg7[%c0_16, %c0_17], %23 {strides = array<i32>} : memref<8x128xbf16, #tpu.memory_space<vmem>>, vector<8x128xbf16>,
    } else {
    }
    return
  }
  func.func @transform_0(%arg0: i32, %arg1: i32, %arg2: i32, %arg3: memref<1xf32, #tpu.memory_space<smem>>) -> (i32, i32) {
    %c0_i32 = arith.constant 0 : i32
    return %arg0, %arg2 : i32, i32
  }
  func.func @transform_1(%arg0: i32, %arg1: i32, %arg2: i32, %arg3: memref<1xf32, #tpu.memory_space<smem>>) -> (i32, i32) {
    %c0_i32 = arith.constant 0 : i32
    return %arg2, %arg1 : i32, i32
  }
  func.func @transform_2(%arg0: i32, %arg1: i32, %arg2: i32, %arg3: memref<1xf32, #tpu.memory_space<smem>>) -> (i32, i32) {
    %c0_i32 = arith.constant 0 : i32
    %c0_i32_0 = arith.constant 0 : i32
    return %c0_i32, %arg1 : i32, i32
  }
  func.func @transform_3(%arg0: i32, %arg1: i32, %arg2: i32, %arg3: memref<1xf32, #tpu.memory_space<smem>>) -> (i32, i32) {
    %c0_i32 = arith.constant 0 : i32
    return %arg0, %arg1 : i32, i32
  }
}

</mosaic_0001>

<llo_original>
// kernel: tpu_custom_call.1
$region0: #{tpu_custom_call.1}
  #allocation0 [shape = 'u32[]', space=smem, size = 0x4, offset = 0x4, fixed_abs, tag = 'smem constant byte address 0x4 - core index']
  #allocation1 [shape = 'u32[144,128]{1,0:T(1,128)}', space=vmem, size = 0x12000, scoped, tag = 'internal scratch']
  #allocation2 [shape = 'f32[8,128]{1,0:T(8,128)}', space=vmem, size = 0x1000, scoped, tag = 'scratch operand']
  #allocation3 [shape = 's32[1]{0}', space=sflag, size = 0x4, scoped, tag = 'scoped memory for tpu_custom_call.1']
  #allocation4 [shape = 'f32[1]{0:T(128)S(6)}', space=smem, size = 0x200, scoped, tag = 'prefetched SMEM operand 0']
  %s0 = inlined_call_operand.<no memory space> [shape: f32[1], index: 0, kind: input, shape index: {}]
  %s1 = inlined_call_operand.hbm [shape: f32[8,128], index: 1, kind: input, shape index: {}]
  %s2 = inlined_call_operand.hbm [shape: bf16[128,128], index: 2, kind: input, shape index: {}]
  %s3 = inlined_call_operand.vmem [shape: f32[1,128], index: 3, kind: input, shape index: {}]
  %s4 = inlined_call_operand.hbm [shape: bf16[8,128], index: 4, kind: output, shape index: {}]
  %s5 = sld [smem:[#allocation0]]
  $region38: #{tpu_custom_call.1} parent=0
    _
  %s7 = ssub.s32 1, %s5
  %s8 = scalar_select 0, %s7, %s5
  %9 = sst [smem:[#allocation4]] %s0
  $region1: #{tpu_custom_call.1} parent=0
    #allocation5 [shape = 'u8[4096]{0}', space=vmem, size = 0x1000, scoped, tag = 'input window, operand 1, single buffered']
    #allocation6 [shape = 's32[1]{0}', space=sflag, size = 0x4, scoped, tag = 'scoped memory for tpu_custom_call.1']
    #allocation7 [shape = 's32[1]{0}', space=sflag, size = 0x4, scoped, tag = 'scoped memory for tpu_custom_call.1']
    #allocation8 [shape = 'u8[32768]{0}', space=vmem, size = 0x8000, scoped, tag = 'input window, operand 2, single buffered']
    #allocation9 [shape = 's32[1]{0}', space=sflag, size = 0x4, scoped, tag = 'scoped memory for tpu_custom_call.1']
    #allocation10 [shape = 'u8[2048]{0}', space=vmem, size = 0x800, scoped, tag = 'output window, operand 0, single buffered']
    %10 = vsyncpa [#allocation6], 0
    %11 = vsyncpa [#allocation9], 0
    %12 = vsyncpa [#allocation7], 0
    // Predicated region
    $region2: #{tpu_custom_call.1} parent=1 // pred_check
      _
    $region3: #{tpu_custom_call.1} parent=1 // pred_check_branch
      %14 = sbr.rel (0) target = $region5
    $region4: #{tpu_custom_call.1} parent=1 // pred_region
      %s16 = ssub.s32 128, 128
      %17 = vsyncadd [#allocation6], %s16
      %s19 = sshll.u32 [#allocation5], 4
      %s20 = int_to_ptr.vmem [resolvable:$true] %s19
      %22 = dma.hbm_to_vmem [thread:$0]  %s1, 128, %s20, [#allocation6]
    $region5: #{tpu_custom_call.1} parent=1 // pred_fallthru
      _
    // Predicated region
    $region6: #{tpu_custom_call.1} parent=1 // pred_check
      _
    $region7: #{tpu_custom_call.1} parent=1 // pred_check_branch
      %24 = sbr.rel (0) target = $region9
    $region8: #{tpu_custom_call.1} parent=1 // pred_region
      %s26 = ssub.s32 1024, 1024
      %27 = vsyncadd [#allocation9], %s26
      %s28 = sshll.u32 [#allocation8], 4
      %s29 = int_to_ptr.vmem [resolvable:$true] %s28
      %34 = dma.hbm_to_vmem [thread:$0]  %s2, 1024, %s29, [#allocation9], 64, 64, 4
    $region9: #{tpu_custom_call.1} parent=1 // pred_fallthru
      _
    // Predicated region
    $region10: #{tpu_custom_call.1} parent=1 // pred_check
      _
    $region11: #{tpu_custom_call.1} parent=1 // pred_check_branch
      %36 = sbr.rel (0) target = $region13
    $region12: #{tpu_custom_call.1} parent=1 // pred_region
      _
    $region13: #{tpu_custom_call.1} parent=1 // pred_fallthru
      _
    // Predicated region
    $region14: #{tpu_custom_call.1} parent=1 // pred_check
      _
    $region15: #{tpu_custom_call.1} parent=1 // pred_check_branch
      %38 = sbr.rel (0) target = $region17
    $region16: #{tpu_custom_call.1} parent=1 // pred_region
      %39 = dma.done [#allocation6], 128
    $region17: #{tpu_custom_call.1} parent=1 // pred_fallthru
      _
    // Predicated region
    $region18: #{tpu_custom_call.1} parent=1 // pred_check
      _
    $region19: #{tpu_custom_call.1} parent=1 // pred_check_branch
      %41 = sbr.rel (0) target = $region21
    $region20: #{tpu_custom_call.1} parent=1 // pred_region
      %42 = dma.done [#allocation9], 1024
    $region21: #{tpu_custom_call.1} parent=1 // pred_fallthru
      _
    %p44 = scmp.eq.s32.totalorder 0, 0
    // Predicated region
    $region22: #{tpu_custom_call.1} parent=1 // pred_check
      %p45 = pneg %p44
    $region23: #{tpu_custom_call.1} parent=1 // pred_check_branch
      %47 = sbr.rel (%p45) target = $region25
    $region24: #{tpu_custom_call.1} parent=1 // pred_region
      %48 = vst [vmem:[#allocation2] sm:$0xff] 0.0
    $region25: #{tpu_custom_call.1} parent=1 // pred_fallthru
      _
    %v49 = vld [vmem:[#allocation5] sm:$0xff]
    %v50 = vpack.c.bf16 %v49, %v49
    %v51 = vld [vmem:[#allocation2] sm:$0xff]
    %v52 = vld [vmem:[#allocation8] sm:$0xf]
    %v53 = vld [vmem:[#allocation8 + $0x4] sm:$0xf]
    %v54 = vld [vmem:[#allocation8 + $0x8] sm:$0xf]
    %v55 = vld [vmem:[#allocation8 + $0xc] sm:$0xf]
    %v56 = vld [vmem:[#allocation8 + $0x10] sm:$0xf]
    %v57 = vld [vmem:[#allocation8 + $0x14] sm:$0xf]
    %v58 = vld [vmem:[#allocation8 + $0x18] sm:$0xf]
    %v59 = vld [vmem:[#allocation8 + $0x1c] sm:$0xf]
    %v60 = vld [vmem:[#allocation8 + $0x20] sm:$0xf]
    %v61 = vld [vmem:[#allocation8 + $0x24] sm:$0xf]
    %v62 = vld [vmem:[#allocation8 + $0x28] sm:$0xf]
    %v63 = vld [vmem:[#allocation8 + $0x2c] sm:$0xf]
    %v64 = vld [vmem:[#allocation8 + $0x30] sm:$0xf]
    %v65 = vld [vmem:[#allocation8 + $0x34] sm:$0xf]
    %v66 = vld [vmem:[#allocation8 + $0x38] sm:$0xf]
    %v67 = vld [vmem:[#allocation8 + $0x3c] sm:$0xf]
    %v84 = vunpack.c.l.b16 %v52
    %v85 = vunpack.c.l.b16 %v53
    %v86 = vunpack.c.l.b16 %v54
    %v87 = vunpack.c.l.b16 %v55
    %v88 = vunpack.c.l.b16 %v56
    %v89 = vunpack.c.l.b16 %v57
    %v90 = vunpack.c.l.b16 %v58
    %v91 = vunpack.c.l.b16 %v59
    %v92 = vunpack.c.l.b16 %v60
    %v93 = vunpack.c.l.b16 %v61
    %v94 = vunpack.c.l.b16 %v62
    %v95 = vunpack.c.l.b16 %v63
    %v96 = vunpack.c.l.b16 %v64
    %v97 = vunpack.c.l.b16 %v65
    %v98 = vunpack.c.l.b16 %v66
    %v99 = vunpack.c.l.b16 %v67
    %v100 = vpack.c.b16 %v85, %v84
    %v101 = vpack.c.b16 %v87, %v86
    %v102 = vpack.c.b16 %v89, %v88
    %v103 = vpack.c.b16 %v91, %v90
    %v104 = vpack.c.b16 %v93, %v92
    %v105 = vpack.c.b16 %v95, %v94
    %v106 = vpack.c.b16 %v97, %v96
    %v107 = vpack.c.b16 %v99, %v98
    %116 = vmatprep.subr.bf16.mxu0 0
    %117 = vmatpush1.bf16.msra.mxu0 %v100
    %118 = vmatprep.subr.bf16.mxu0 0
    %119 = vmatpush1.bf16.msra.mxu0 %v101
    %120 = vmatprep.subr.bf16.mxu0 0
    %121 = vmatpush1.bf16.msra.mxu0 %v102
    %122 = vmatprep.subr.bf16.mxu0 0
    %123 = vmatpush1.bf16.msra.mxu0 %v103
    %124 = vmatprep.subr.bf16.mxu0 0
    %125 = vmatpush1.bf16.msra.mxu0 %v104
    %126 = vmatprep.subr.bf16.mxu0 0
    %127 = vmatpush1.bf16.msra.mxu0 %v105
    %128 = vmatprep.subr.bf16.mxu0 0
    %129 = vmatpush1.bf16.msra.mxu0 %v106
    %130 = vmatprep.subr.bf16.mxu0 0
    %131 = vmatpush1.bf16.msra.mxu0 %v107
    %132 = vmatprep.subr.bf16.mxu0 0
    %133 = vmatpush1.bf16.msra.mxu0 0
    %134 = vmatprep.subr.bf16.mxu0 0
    %135 = vmatpush1.bf16.msra.mxu0 0
    %136 = vmatprep.subr.bf16.mxu0 0
    %137 = vmatpush1.bf16.msra.mxu0 0
    %138 = vmatprep.subr.bf16.mxu0 0
    %139 = vmatpush1.bf16.msra.mxu0 0
    %140 = vmatprep.subr.bf16.mxu0 0
    %141 = vmatpush1.bf16.msra.mxu0 0
    %142 = vmatprep.subr.bf16.mxu0 0
    %143 = vmatpush1.bf16.msra.mxu0 0
    %144 = vmatprep.subr.bf16.mxu0 0
    %145 = vmatpush1.bf16.msra.mxu0 0
    %146 = vmatprep.subr.bf16.mxu0 0
    %147 = vmatpush1.bf16.msra.mxu0 0
    %148 = vmatprep.mubr.bf16.mxu0 0
    %149 = vmatmul.mubr.bf16.gmra.mrb[0].mxu0 %v50
    %v150 = vpop.f32.mrb[0].mxu0
    %v151 = vadd.f32 0.0, %v150
    %v152 = vpop.f32.mrb[0].mxu0
    %v153 = vpop.f32.mrb[0].mxu0
    %v154 = vpop.f32.mrb[0].mxu0
    %155 = vdwg.mxu0
    %v156 = vadd.f32 %v51, %v151
    %157 = vst [vmem:[#allocation2] sm:$0xff] %v156
    // Predicated region
    $region26: #{tpu_custom_call.1} parent=1 // pred_check
      %p158 = pneg %p44
    $region27: #{tpu_custom_call.1} parent=1 // pred_check_branch
      %160 = sbr.rel (%p158) target = $region29
    $region28: #{tpu_custom_call.1} parent=1 // pred_region
      %v161 = vld [vmem:[#allocation2] sm:$0xff]
      %v162 = vld [vmem:[%s3] sm:$0x1]
      %v164 = vlaneseq
      %v165 = vshrl.u32 %v164, 7
      %v166 = vsub.s32 0, %v165
      %v167 = vrot.slane %v162, %v166
      %v169 = vadd.f32 %v161, %v167
      %s170 = sld [smem:[#allocation4]]
      %vm171 = vcmp.gt.f32.partialorder %v169, 0.0
      %v172 = vstv %s170
      %v173 = vmul.f32 %v172, %v169
      %v174 = vsel %vm171, %v169, %v173
      %v175 = vpack.c.bf16 %v174, %v174
      %176 = vst [vmem:[#allocation10] sm:$0xf] %v175
    $region29: #{tpu_custom_call.1} parent=1 // pred_fallthru
      _
    // Predicated region
    $region30: #{tpu_custom_call.1} parent=1 // pred_check
      _
    $region31: #{tpu_custom_call.1} parent=1 // pred_check_branch
      %178 = sbr.rel (0) target = $region33
    $region32: #{tpu_custom_call.1} parent=1 // pred_region
      %s180 = ssub.s32 64, 64
      %181 = vsyncadd [#allocation7], %s180
      %s183 = sshll.u32 [#allocation10], 4
      %s184 = int_to_ptr.vmem [resolvable:$true] %s183
      %186 = dma.vmem_to_hbm [thread:$0]  %s184, 64, %s4, [#allocation7]
    $region33: #{tpu_custom_call.1} parent=1 // pred_fallthru
      _
    // Predicated region
    $region34: #{tpu_custom_call.1} parent=1 // pred_check
      _
    $region35: #{tpu_custom_call.1} parent=1 // pred_check_branch
      %188 = sbr.rel (0) target = $region37
    $region36: #{tpu_custom_call.1} parent=1 // pred_region
      %189 = dma.done [#allocation7], 64
    $region37: #{tpu_custom_call.1} parent=1 // pred_fallthru
      _
    %190 = vsyncpa [#allocation6], 1
    %191 = vsyncpa [#allocation9], 1
    %192 = vsyncpa [#allocation7], 1

</llo_original>
